<compile_context>
chip_gen: v5e
topology: v5e:2x2
jax: 0.10.0
libtpu: 0.0.40
codegen_flags: <defaults>
</compile_context>

<pallas_src>
import numpy as np
import jax
import jax.numpy as jnp
from jax.experimental import pallas as pl
from jax.experimental.pallas import tpu as pltpu

LANE = 128
EB = 8                 # events per grid block (output rows per block, sublane-aligned)
MIN_NPAD = 1024        # minimum padded node count per event (8 sublanes x 128 lanes)
MAX_CHUNK_R = 256      # node-axis chunk = 256*128 = 32768 nodes (~1.3 MiB f32 / step)


def _chunk_r_for(r_glob):
    """Node-axis chunk height (in rows of 128). Full dim if small, else 256."""
    return r_glob if r_glob <= MAX_CHUNK_R else MAX_CHUNK_R


def _ce_acc_kernel(nchunks_ref, d_ref, lab_ref, out_ref):
    """Accumulate per-event CE-loss sum and #correct over node chunks.

    nchunks_ref: (n_blocks,)      i32 SMEM -- #real node chunks per event block
    d_ref      : (EB, Rt, 128)    f32 VMEM -- margins d = logit1 - logit0
    lab_ref    : (EB, Rt, 128)    i8  VMEM -- labels, -1 marks padding
    out_ref    : (EB, 128)        f32 VMEM -- lane 0: sum CE loss, lane 1: #correct
    """
    ge = pl.program_id(0)
    gr = pl.program_id(1)

    @pl.when(gr == 0)
    def _():
        out_ref[...] = jnp.zeros_like(out_ref)

    @pl.when(gr < nchunks_ref[ge])
    def _():
        d = d_ref[...]                            # f32 compute throughout
        labels = lab_ref[...].astype(jnp.int32)   # upcast right after int8 load
        valid = labels >= 0

        # 2-class CE as stable softplus of the signed margin:
        #   label==1: log(1 + exp(-d)); label==0: log(1 + exp(d))
        x = jnp.where(labels == 1, -d, d)
        per_node = jnp.maximum(x, 0.0) + jnp.log(1.0 + jnp.exp(-jnp.abs(x)))
        per_node = jnp.where(valid, per_node, 0.0)
        loss_sum = jnp.sum(jnp.sum(per_node, axis=-1), axis=-1)       # (EB,)

        # torch.argmax(dim=1) tie-break: predict class 1 only if l1 > l0 (d > 0)
        pred = (d > 0.0).astype(jnp.int32)
        hit = jnp.where(valid & (pred == labels), 1.0, 0.0)
        correct = jnp.sum(jnp.sum(hit, axis=-1), axis=-1)             # (EB,)

        lane = jax.lax.broadcasted_iota(jnp.int32, (EB, LANE), 1)
        out_ref[...] += jnp.where(lane == 0, loss_sum[:, None],
                                  jnp.where(lane == 1, correct[:, None], 0.0))


@jax.jit
def _batched_loss_acc(nchunks, counts, margins, labels):
    """nchunks (n_blocks,) i32, counts (E_pad,) i32, margins (E_pad,R,128) f32,
    labels (E_pad,R,128) i8 -> (mean-over-events loss, mean-over-events acc)."""
    e_pad, r_glob, _ = margins.shape
    n_blocks = e_pad // EB
    rt = _chunk_r_for(r_glob)
    n_chunks = r_glob // rt

    def in_map(ge, gr, nck):
        # Clamp past-the-end chunks to the last real chunk of this event block:
        # the block index doesn't change, so the DMA is skipped and pl.when
        # skips the compute.
        return (ge, jnp.minimum(gr, nck[ge] - 1), 0)

    per_event = pl.pallas_call(
        _ce_acc_kernel,
        out_shape=jax.ShapeDtypeStruct((e_pad, LANE), jnp.float32),
        grid_spec=pltpu.PrefetchScalarGridSpec(
            num_scalar_prefetch=1,
            grid=(n_blocks, n_chunks),
            in_specs=[
                pl.BlockSpec((EB, rt, LANE), in_map),
                pl.BlockSpec((EB, rt, LANE), in_map),
            ],
            out_specs=pl.BlockSpec((EB, LANE), lambda ge, gr, nck: (ge, 0)),
        ),
        compiler_params=pltpu.CompilerParams(
            dimension_semantics=("parallel", "arbitrary")),
    )(nchunks, margins, labels)

    loss_sum_e = per_event[:, 0]                       # per-event CE loss sum
    corr_e = per_event[:, 1]                           # per-event #correct
    cnt = jnp.maximum(counts, 1).astype(jnp.float32)   # padded events contribute 0
    n_ev = jnp.sum((counts > 0).astype(jnp.float32))
    loss = jnp.sum(loss_sum_e / cnt) / n_ev            # reduction='mean' per event
    acc = jnp.sum(corr_e / cnt) / n_ev                 # divide by len(clusts)
    return loss, acc


def _primary_labels(labels_np, clusts):
    """Vectorized primary-id derivation: any(id == groupid) per cluster."""
    # TODO(synk): ragged per-cluster gather (variable-length index lists) has no
    # clean Pallas equivalent; kept in vectorized host numpy glue.
    eq = labels_np[:, -3] == labels_np[:, -2]
    lens = np.fromiter((len(c) for c in clusts), dtype=np.int64, count=len(clusts))
    flat = np.concatenate([np.asarray(c, dtype=np.int64) for c in clusts])
    seg = np.repeat(np.arange(len(clusts), dtype=np.int64), lens)
    hits = np.zeros(len(clusts), dtype=bool)
    np.logical_or.at(hits, seg, eq[flat])
    return hits.astype(np.int32)


def node_channel_loss_forward(out, clusters):
    """Mirrors NodeChannelLoss.forward (loss='CE', reduction='mean')."""
    if 'node_pred' not in out:
        return {'accuracy': 0.0, 'loss': jnp.array(0.0, dtype=jnp.float32)}

    preds, assns = [], []
    for i in range(len(clusters)):
        cl_i = np.asarray(clusters[i])
        batches = cl_i[:, 3].astype(np.int64)
        nbatches = len(np.unique(batches))
        for j in range(nbatches):
            labels = cl_i[batches == j]
            node_pred = np.asarray(out['node_pred'][i][j], dtype=np.float32)
            if not node_pred.shape[0]:
                continue
            clusts = out['clusts'][i][j]
            preds.append(node_pred)
            assns.append(_primary_labels(labels, clusts))

    n_events = len(preds)
    if not n_events:
        return {'accuracy': 0.0, 'loss': jnp.array(0.0, dtype=jnp.float32)}

    # Sort events by node count (desc) so each EB-event block is size-homogeneous
    # and per-block ragged chunk counts skip most padding work.
    sizes = np.array([p.shape[0] for p in preds], dtype=np.int64)
    order = np.argsort(-sizes, kind='stable')

    # Bucketed global node padding -> stable compiled shapes across calls.
    max_nc = int(sizes.max())
    chunk_nodes_max = MAX_CHUNK_R * LANE
    if max_nc <= chunk_nodes_max:
        npad = max(MIN_NPAD, int(pl.next_power_of_2(max_nc)))
    else:
        npad = int(pl.next_power_of_2(-(-max_nc // chunk_nodes_max))) * chunk_nodes_max
    r_glob = npad // LANE

    n_blocks = -(-n_events // EB)
    e_pad = n_blocks * EB

    margins = np.zeros((e_pad, npad), dtype=np.float32)    # d = logit1 - logit0
    labels_pk = np.full((e_pad, npad), -1, dtype=np.int8)  # -1 marks padding
    counts = np.zeros((e_pad,), dtype=np.int32)
    for e, k in enumerate(order):
        p, a = preds[k], assns[k]
        nc = p.shape[0]
        counts[e] = nc
        margins[e, :nc] = p[:, 1] - p[:, 0]
        labels_pk[e, :nc] = a.astype(np.int8)

    rt = _chunk_r_for(r_glob)
    chunk_nodes = rt * LANE
    nchunks = np.maximum(
        1, -(-counts.reshape(n_blocks, EB).max(axis=1) // chunk_nodes)
    ).astype(np.int32)

    margins = margins.reshape(e_pad, r_glob, LANE)
    labels_pk = labels_pk.reshape(e_pad, r_glob, LANE)

    loss, acc = jax.block_until_ready(
        _batched_loss_acc(jnp.asarray(nchunks), jnp.asarray(counts),
                          jnp.asarray(margins), jnp.asarray(labels_pk)))
    return {'accuracy': float(acc), 'loss': loss}


def _reference_forward(out, clusters):
    """Pure numpy reference of the same forward (float64)."""
    total_loss, total_acc, n_events = 0.0, 0.0, 0
    for i in range(len(clusters)):
        cl_i = np.asarray(clusters[i])
        batches = cl_i[:, 3].astype(np.int64)
        for j in range(len(np.unique(batches))):
            labels = cl_i[batches == j]
            node_pred = np.asarray(out['node_pred'][i][j], dtype=np.float64)
            if not node_pred.shape[0]:
                continue
            clusts = out['clusts'][i][j]
            node_assn = np.array(
                [int((labels[c, -3] == labels[c, -2]).any()) for c in clusts],
                dtype=np.int64)
            mx = node_pred.max(axis=1, keepdims=True)
            lse = np.log(np.exp(node_pred - mx).sum(axis=1)) + mx[:, 0]
            per = lse - node_pred[np.arange(len(node_assn)), node_assn]
            total_loss += per.mean()
            pred = np.argmax(node_pred, axis=1)
            total_acc += float((pred == node_assn).sum()) / len(clusts)
            n_events += 1
    return total_loss / n_events, total_acc / n_events


def _make_inputs():
    key = jax.random.PRNGKey(0)
    n_inputs, n_batches = 2, 2
    clust_counts = [[3, 5], [4, 7]]   # ragged cluster counts per (input, batch)
    vox_per = 6

    clusters, node_pred_list, clusts_list = [], [], []
    for i in range(n_inputs):
        vox_rows, np_i, cl_i = [], [], []
        for j in range(n_batches):
            n_clusts = clust_counts[i][j]
            key, k1, k2, k3, kp = jax.random.split(key, 5)
            n_vox = n_clusts * vox_per
            xyz = jax.random.normal(k1, (n_vox, 3), dtype=jnp.float32)
            ids = jax.random.randint(k2, (n_vox,), 0, 3).astype(jnp.float32)
            gids = jax.random.randint(k3, (n_vox,), 0, 3).astype(jnp.float32)
            batchid = jnp.full((n_vox, 1), float(j), dtype=jnp.float32)
            value = jnp.ones((n_vox, 1), dtype=jnp.float32)
            shape = jnp.zeros((n_vox, 1), dtype=jnp.float32)
            # (N, 8): [x, y, z, batchid, value, id, groupid, shape]
            rows = jnp.concatenate(
                [xyz, batchid, value, ids[:, None], gids[:, None], shape], axis=1)
            vox_rows.append(rows)
            # cluster index lists into the batch-filtered voxel table
            cl_i.append([np.arange(c * vox_per, (c + 1) * vox_per) for c in range(n_clusts)])
            np_i.append(np.asarray(jax.random.normal(kp, (n_clusts, 2), dtype=jnp.float32)))
        clusters.append(np.asarray(jnp.concatenate(vox_rows, axis=0)))
        node_pred_list.append(np_i)
        clusts_list.append(cl_i)

    out = {'node_pred': node_pred_list, 'clusts': clusts_list}
    return out, clusters


if __name__ == "__main__":
    out, clusters = _make_inputs()

    result = node_channel_loss_forward(out, clusters)
    ref_loss, ref_acc = _reference_forward(out, clusters)

    np.testing.assert_allclose(float(result['loss']), ref_loss, rtol=1e-4, atol=1e-5)
    np.testing.assert_allclose(float(result['accuracy']), ref_acc, rtol=1e-5, atol=1e-6)

    print("KERNEL_OK")
</pallas_src>

<mosaic_0001>
module attributes {stable_mosaic.version = 11 : i64} {
  func.func @_ce_acc_kernel(%arg0: i32, %arg1: i32, %arg2: memref<1xi32, #tpu.memory_space<smem>>, %arg3: memref<8x8x128xf32, #tpu.memory_space<vmem>>, %arg4: memref<8x8x128xi8, #tpu.memory_space<vmem>>, %arg5: memref<8x128xf32, #tpu.memory_space<vmem>>) attributes {dimension_semantics = [#tpu.dimension_semantics<parallel>, #tpu.dimension_semantics<arbitrary>], iteration_bounds = array<i64: 1, 1>, scalar_prefetch = 1 : i64, scratch_operands = 0 : i64, tpu.core_type = #tpu.core_type<tc>, window_params = [{transform_indices = @transform_0, window_bounds = array<i64: 8, 8, 128>}, {transform_indices = @transform_1, window_bounds = array<i64: 8, 8, 128>}, {transform_indices = @transform_2, window_bounds = array<i64: 8, 128>}]} {
    %c0_i32 = arith.constant 0 : i32
    %0 = arith.cmpi eq, %arg1, %c0_i32 : i32
    %1 = arith.extui %0 : i1 to i32
    %c0_i32_0 = arith.constant 0 : i32
    %2 = arith.cmpi ne, %1, %c0_i32_0 : i32
    scf.if %2 {
      %cst = arith.constant 0.000000e+00 : f32
      %8 = vector.broadcast %cst : f32 to vector<8x128xf32>
      %c0 = arith.constant 0 : index
      %c0_2 = arith.constant 0 : index
      %9 = vector.load %arg5[%c0, %c0_2] : memref<8x128xf32, #tpu.memory_space<vmem>>, vector<8x128xf32>
      tpu.vector_store %arg5[%c0, %c0_2], %8 {strides = array<i32>} : memref<8x128xf32, #tpu.memory_space<vmem>>, vector<8x128xf32>,
    } else {
    }
    %3 = arith.index_cast %arg0 : i32 to index
    %4 = memref.load %arg2[%3] : memref<1xi32, #tpu.memory_space<smem>>
    %5 = arith.cmpi slt, %arg1, %4 : i32
    %6 = arith.extui %5 : i1 to i32
    %c0_i32_1 = arith.constant 0 : i32
    %7 = arith.cmpi ne, %6, %c0_i32_1 : i32
    scf.if %7 {
      %c0 = arith.constant 0 : index
      %c0_2 = arith.constant 0 : index
      %c0_3 = arith.constant 0 : index
      %8 = vector.load %arg3[%c0, %c0_2, %c0_3] : memref<8x8x128xf32, #tpu.memory_space<vmem>>, vector<8x8x128xf32>
      %c0_4 = arith.constant 0 : index
      %c0_5 = arith.constant 0 : index
      %c0_6 = arith.constant 0 : index
      %9 = vector.load %arg4[%c0_4, %c0_5, %c0_6] : memref<8x8x128xi8, #tpu.memory_space<vmem>>, vector<8x8x128xi8>
      %10 = arith.extsi %9 : vector<8x8x128xi8> to vector<8x8x128xi32>
      %c0_i32_7 = arith.constant 0 : i32
      %11 = vector.broadcast %c0_i32_7 : i32 to vector<8x8x128xi32>
      %12 = arith.cmpi sge, %10, %11 : vector<8x8x128xi32>
      %c1_i32 = arith.constant 1 : i32
      %13 = vector.broadcast %c1_i32 : i32 to vector<8x8x128xi32>
      %14 = arith.cmpi eq, %10, %13 : vector<8x8x128xi32>
      %cst = arith.constant 0.000000e+00 : f32
      %15 = vector.broadcast %cst : f32 to vector<8x8x128xf32>
      %16 = arith.subf %15, %8 : vector<8x8x128xf32>
      %17 = arith.select %14, %16, %8 : vector<8x8x128xi1>, vector<8x8x128xf32>
      %cst_8 = arith.constant 0.000000e+00 : f32
      %18 = vector.broadcast %cst_8 : f32 to vector<8x8x128xf32>
      %19 = arith.maximumf %17, %18 : vector<8x8x128xf32>
      %20 = math.absf %17 : vector<8x8x128xf32>
      %cst_9 = arith.constant 0.000000e+00 : f32
      %21 = vector.broadcast %cst_9 : f32 to vector<8x8x128xf32>
      %22 = arith.subf %21, %20 : vector<8x8x128xf32>
      %23 = math.exp %22 : vector<8x8x128xf32>
      %cst_10 = arith.constant 1.000000e+00 : f32
      %24 = vector.broadcast %cst_10 : f32 to vector<8x8x128xf32>
      %25 = arith.addf %24, %23 : vector<8x8x128xf32>
      %26 = math.log %25 : vector<8x8x128xf32>
      %27 = arith.addf %19, %26 : vector<8x8x128xf32>
      %cst_11 = arith.constant 0.000000e+00 : f32
      %28 = vector.broadcast %cst_11 : f32 to vector<8x8x128xf32>
      %29 = arith.select %12, %27, %28 : vector<8x8x128xi1>, vector<8x8x128xf32>
      %cst_12 = arith.constant dense<0.000000e+00> : vector<8x8xf32>
      %30 = vector.multi_reduction <add>, %29, %cst_12 [2] : vector<8x8x128xf32> to vector<8x8xf32>
      %cst_13 = arith.constant dense<0.000000e+00> : vector<8xf32>
      %31 = vector.multi_reduction <add>, %30, %cst_13 [1] : vector<8x8xf32> to vector<8xf32>
      %cst_14 = arith.constant 0.000000e+00 : f32
      %32 = vector.broadcast %cst_14 : f32 to vector<8x8x128xf32>
      %33 = arith.cmpf ogt, %8, %32 : vector<8x8x128xf32>
      %34 = arith.extui %33 : vector<8x8x128xi1> to vector<8x8x128xi32>
      %35 = arith.cmpi eq, %34, %10 : vector<8x8x128xi32>
      %36 = arith.andi %12, %35 : vector<8x8x128xi1>
      %cst_15 = arith.constant 1.000000e+00 : f32
      %cst_16 = arith.constant 0.000000e+00 : f32
      %37 = vector.broadcast %cst_15 : f32 to vector<8x8x128xf32>
      %38 = vector.broadcast %cst_16 : f32 to vector<8x8x128xf32>
      %39 = arith.select %36, %37, %38 : vector<8x8x128xi1>, vector<8x8x128xf32>
      %cst_17 = arith.constant dense<0.000000e+00> : vector<8x8xf32>
      %40 = vector.multi_reduction <add>, %39, %cst_17 [2] : vector<8x8x128xf32> to vector<8x8xf32>
      %cst_18 = arith.constant dense<0.000000e+00> : vector<8xf32>
      %41 = vector.multi_reduction <add>, %40, %cst_18 [1] : vector<8x8xf32> to vector<8xf32>
      %42 = tpu.iota {dimensions = array<i32: 1>} : vector<8x128xi32>
      %c0_19 = arith.constant 0 : index
      %c0_20 = arith.constant 0 : index
      %43 = vector.load %arg5[%c0_19, %c0_20] : memref<8x128xf32, #tpu.memory_space<vmem>>, vector<8x128xf32>
      %c0_i32_21 = arith.constant 0 : i32
      %44 = vector.broadcast %c0_i32_21 : i32 to vector<8x128xi32>
      %45 = arith.cmpi eq, %42, %44 : vector<8x128xi32>
      %46 = vector.shape_cast %31 : vector<8xf32> to vector<8x1xf32>
      %c1_i32_22 = arith.constant 1 : i32
      %47 = vector.broadcast %c1_i32_22 : i32 to vector<8x128xi32>
      %48 = arith.cmpi eq, %42, %47 : vector<8x128xi32>
      %49 = vector.shape_cast %41 : vector<8xf32> to vector<8x1xf32>
      %cst_23 = arith.constant 0.000000e+00 : f32
      %50 = vector.shape_cast %49 : vector<8x1xf32> to vector<8x1xf32>
      %51 = vector.broadcast %50 : vector<8x1xf32> to vector<8x128xf32>
      %52 = vector.broadcast %cst_23 : f32 to vector<8x128xf32>
      %53 = arith.select %48, %51, %52 : vector<8x128xi1>, vector<8x128xf32>
      %54 = vector.shape_cast %46 : vector<8x1xf32> to vector<8x1xf32>
      %55 = vector.broadcast %54 : vector<8x1xf32> to vector<8x128xf32>
      %56 = arith.select %45, %55, %53 : vector<8x128xi1>, vector<8x128xf32>
      %57 = arith.addf %43, %56 : vector<8x128xf32>
      %c0_24 = arith.constant 0 : index
      %c0_25 = arith.constant 0 : index
      %58 = vector.load %arg5[%c0_24, %c0_25] : memref<8x128xf32, #tpu.memory_space<vmem>>, vector<8x128xf32>
      tpu.vector_store %arg5[%c0_24, %c0_25], %57 {strides = array<i32>} : memref<8x128xf32, #tpu.memory_space<vmem>>, vector<8x128xf32>,
    } else {
    }
    return
  }
  func.func @transform_0(%arg0: i32, %arg1: i32, %arg2: memref<1xi32, #tpu.memory_space<smem>>) -> (i32, i32, i32) {
    %0 = arith.index_cast %arg0 : i32 to index
    %1 = memref.load %arg2[%0] : memref<1xi32, #tpu.memory_space<smem>>
    %c1_i32 = arith.constant 1 : i32
    %2 = arith.subi %1, %c1_i32 : i32
    %3 = arith.minsi %arg1, %2 : i32
    %c0_i32 = arith.constant 0 : i32
    %c0_i32_0 = arith.constant 0 : i32
    return %arg0, %3, %c0_i32 : i32, i32, i32
  }
  func.func @transform_1(%arg0: i32, %arg1: i32, %arg2: memref<1xi32, #tpu.memory_space<smem>>) -> (i32, i32, i32) {
    %0 = arith.index_cast %arg0 : i32 to index
    %1 = memref.load %arg2[%0] : memref<1xi32, #tpu.memory_space<smem>>
    %c1_i32 = arith.constant 1 : i32
    %2 = arith.subi %1, %c1_i32 : i32
    %3 = arith.minsi %arg1, %2 : i32
    %c0_i32 = arith.constant 0 : i32
    %c0_i32_0 = arith.constant 0 : i32
    return %arg0, %3, %c0_i32 : i32, i32, i32
  }
  func.func @transform_2(%arg0: i32, %arg1: i32, %arg2: memref<1xi32, #tpu.memory_space<smem>>) -> (i32, i32) {
    %c0_i32 = arith.constant 0 : i32
    %c0_i32_0 = arith.constant 0 : i32
    return %arg0, %c0_i32 : i32, i32
  }
}

</mosaic_0001>

<llo_original>
// kernel: _batched_loss_acc.1
$region0: #{_batched_loss_acc.1}
  #allocation0 [shape = 'u32[]', space=smem, size = 0x4, offset = 0x4, fixed_abs, tag = 'smem constant byte address 0x4 - core index']
  #allocation1 [shape = 'u32[72,128]{1,0:T(1,128)}', space=vmem, size = 0x9000, scoped, tag = 'internal scratch']
  #allocation2 [shape = 's32[1]{0}', space=sflag, size = 0x4, scoped, tag = 'scoped memory for _batched_loss_acc.1']
  #allocation3 [shape = 's32[1]{0:T(128)S(6)}', space=smem, size = 0x200, scoped, tag = 'prefetched SMEM operand 0']
  %s0 = inlined_call_operand.<no memory space> [shape: s32[1], index: 0, kind: input, shape index: {}]
  %s1 = inlined_call_operand.hbm [shape: f32[8,8,128], index: 1, kind: input, shape index: {}]
  %s2 = inlined_call_operand.hbm [shape: s8[8,8,128], index: 2, kind: input, shape index: {}]
  %s3 = inlined_call_operand.vmem [shape: f32[8,128], index: 3, kind: output, shape index: {}]
  %s4 = sld [smem:[#allocation0]]
  $region34: #{_batched_loss_acc.1} parent=0
    _
  %s6 = ssub.s32 1, %s4
  %s7 = scalar_select 0, %s6, %s4
  %8 = sst [smem:[#allocation3]] %s0
  $region1: #{_batched_loss_acc.1} parent=0
    #allocation4 [shape = 'u8[32768]{0}', space=vmem, size = 0x8000, scoped, tag = 'input window, operand 1, single buffered']
    #allocation5 [shape = 's32[1]{0}', space=sflag, size = 0x4, scoped, tag = 'scoped memory for _batched_loss_acc.1']
    #allocation6 [shape = 'u8[8192]{0}', space=vmem, size = 0x2000, scoped, tag = 'input window, operand 2, single buffered']
    #allocation7 [shape = 's32[1]{0}', space=sflag, size = 0x4, scoped, tag = 'scoped memory for _batched_loss_acc.1']
    %9 = vsyncpa [#allocation5], 0
    %10 = vsyncpa [#allocation7], 0
    // Predicated region
    $region2: #{_batched_loss_acc.1} parent=1 // pred_check
      _
    $region3: #{_batched_loss_acc.1} parent=1 // pred_check_branch
      %12 = sbr.rel (0) target = $region5
    $region4: #{_batched_loss_acc.1} parent=1 // pred_region
      %s13 = sld [smem:[#allocation3]]
      %s14 = ssub.s32 %s13, 1
      %p15 = scmp.lt.s32.totalorder 0, %s14
      %s16 = scalar_select %p15, 0, %s14
      %18 = vsyncadd [#allocation5], 0
      %s19 = smul.addr %s16, 8
      %s20 = scalar_lea.hbm %s1, %s19
      %s21 = sshll.u32 %s20, 4
      %s22 = int_to_ptr.hbm [resolvable:$true] %s21
      %s23 = sshll.u32 [#allocation4], 4
      %s24 = int_to_ptr.vmem [resolvable:$true] %s23
      %29 = dma.hbm_to_vmem [thread:$0]  %s22, 1024, %s24, [#allocation5], 128, 128, 8
    $region5: #{_batched_loss_acc.1} parent=1 // pred_fallthru
      _
    // Predicated region
    $region6: #{_batched_loss_acc.1} parent=1 // pred_check
      _
    $region7: #{_batched_loss_acc.1} parent=1 // pred_check_branch
      %31 = sbr.rel (0) target = $region9
    $region8: #{_batched_loss_acc.1} parent=1 // pred_region
      %s32 = sld [smem:[#allocation3]]
      %s33 = ssub.s32 %s32, 1
      %p34 = scmp.lt.s32.totalorder 0, %s33
      %s35 = scalar_select %p34, 0, %s33
      %37 = vsyncadd [#allocation7], 0
      %s38 = smul.addr %s35, 2
      %s39 = scalar_lea.hbm %s2, %s38
      %s40 = sshll.u32 %s39, 4
      %s41 = int_to_ptr.hbm [resolvable:$true] %s40
      %s42 = sshll.u32 [#allocation6], 4
      %s43 = int_to_ptr.vmem [resolvable:$true] %s42
      %48 = dma.hbm_to_vmem [thread:$0]  %s41, 256, %s43, [#allocation7], 32, 32, 2
    $region9: #{_batched_loss_acc.1} parent=1 // pred_fallthru
      _
    // Predicated region
    $region10: #{_batched_loss_acc.1} parent=1 // pred_check
      _
    $region11: #{_batched_loss_acc.1} parent=1 // pred_check_branch
      %50 = sbr.rel (0) target = $region13
    $region12: #{_batched_loss_acc.1} parent=1 // pred_region
      %52 = dma.done [#allocation5], 1024
    $region13: #{_batched_loss_acc.1} parent=1 // pred_fallthru
      _
    // Predicated region
    $region14: #{_batched_loss_acc.1} parent=1 // pred_check
      _
    $region15: #{_batched_loss_acc.1} parent=1 // pred_check_branch
      %54 = sbr.rel (0) target = $region17
    $region16: #{_batched_loss_acc.1} parent=1 // pred_region
      %56 = dma.done [#allocation7], 256
    $region17: #{_batched_loss_acc.1} parent=1 // pred_fallthru
      _
    %s57 = sld [smem:[#allocation3]]
    %s58 = ssub.s32 %s57, 1
    %p59 = scmp.lt.s32.totalorder 0, %s58
    %s60 = scalar_select %p59, 0, %s58
    %s61 = sld [smem:[#allocation3]]
    %s62 = ssub.s32 %s61, 1
    %p63 = scmp.lt.s32.totalorder 0, %s62
    %s64 = scalar_select %p63, 0, %s62
    %p65 = scmp.eq.s32.totalorder 0, 0
    // Predicated region
    $region18: #{_batched_loss_acc.1} parent=1 // pred_check
      %p66 = pneg %p65
    $region19: #{_batched_loss_acc.1} parent=1 // pred_check_branch
      %68 = sbr.rel (%p66) target = $region21
    $region20: #{_batched_loss_acc.1} parent=1 // pred_region
      %69 = vst [vmem:[%s3] sm:$0xff] 0.0
    $region21: #{_batched_loss_acc.1} parent=1 // pred_fallthru
      _
    %s70 = sld [smem:[#allocation3]]
    %p71 = scmp.lt.s32.totalorder 0, %s70
    // Predicated region
    $region22: #{_batched_loss_acc.1} parent=1 // pred_check
      %p72 = pneg %p71
    $region23: #{_batched_loss_acc.1} parent=1 // pred_check_branch
      %74 = sbr.rel (%p72) target = $region25
    $region24: #{_batched_loss_acc.1} parent=1 // pred_region
      %v75 = vld [vmem:[#allocation4] sm:$0xff]
      %v76 = vld [vmem:[#allocation4 + $0x8] sm:$0xff]
      %v77 = vld [vmem:[#allocation4 + $0x10] sm:$0xff]
      %v78 = vld [vmem:[#allocation4 + $0x18] sm:$0xff]
      %v79 = vld [vmem:[#allocation4 + $0x20] sm:$0xff]
      %v80 = vld [vmem:[#allocation4 + $0x28] sm:$0xff]
      %v81 = vld [vmem:[#allocation4 + $0x30] sm:$0xff]
      %v82 = vld [vmem:[#allocation4 + $0x38] sm:$0xff]
      %v83 = vld [vmem:[#allocation6] sm:$0x3]
      %v84 = vld [vmem:[#allocation6 + $0x2] sm:$0x3]
      %v85 = vld [vmem:[#allocation6 + $0x4] sm:$0x3]
      %v86 = vld [vmem:[#allocation6 + $0x6] sm:$0x3]
      %v87 = vld [vmem:[#allocation6 + $0x8] sm:$0x3]
      %v88 = vld [vmem:[#allocation6 + $0xa] sm:$0x3]
      %v89 = vld [vmem:[#allocation6 + $0xc] sm:$0x3]
      %v90 = vld [vmem:[#allocation6 + $0xe] sm:$0x3]
      %v91 = vunpack.c.0.s8 %v83
      %v92 = vunpack.c.0.s8 %v84
      %v93 = vunpack.c.0.s8 %v85
      %v94 = vunpack.c.0.s8 %v86
      %v95 = vunpack.c.0.s8 %v87
      %v96 = vunpack.c.0.s8 %v88
      %v97 = vunpack.c.0.s8 %v89
      %v98 = vunpack.c.0.s8 %v90
      %vm99 = vcmp.ge.s32.totalorder %v91, 0
      %vm100 = vcmp.ge.s32.totalorder %v92, 0
      %vm101 = vcmp.ge.s32.totalorder %v93, 0
      %vm102 = vcmp.ge.s32.totalorder %v94, 0
      %vm103 = vcmp.ge.s32.totalorder %v95, 0
      %vm104 = vcmp.ge.s32.totalorder %v96, 0
      %vm105 = vcmp.ge.s32.totalorder %v97, 0
      %vm106 = vcmp.ge.s32.totalorder %v98, 0
      %vm107 = vcmp.eq.s32.totalorder %v91, 1
      %vm108 = vcmp.eq.s32.totalorder %v92, 1
      %vm109 = vcmp.eq.s32.totalorder %v93, 1
      %vm110 = vcmp.eq.s32.totalorder %v94, 1
      %vm111 = vcmp.eq.s32.totalorder %v95, 1
      %vm112 = vcmp.eq.s32.totalorder %v96, 1
      %vm113 = vcmp.eq.s32.totalorder %v97, 1
      %vm114 = vcmp.eq.s32.totalorder %v98, 1
      %v115 = vsub.f32 0.0, %v75
      %v116 = vsub.f32 0.0, %v76
      %v117 = vsub.f32 0.0, %v77
      %v118 = vsub.f32 0.0, %v78
      %v119 = vsub.f32 0.0, %v79
      %v120 = vsub.f32 0.0, %v80
      %v121 = vsub.f32 0.0, %v81
      %v122 = vsub.f32 0.0, %v82
      %v123 = vsel %vm107, %v115, %v75
      %v124 = vsel %vm108, %v116, %v76
      %v125 = vsel %vm109, %v117, %v77
      %v126 = vsel %vm110, %v118, %v78
      %v127 = vsel %vm111, %v119, %v79
      %v128 = vsel %vm112, %v120, %v80
      %v129 = vsel %vm113, %v121, %v81
      %v130 = vsel %vm114, %v122, %v82
      %v131 = vmax.f32 %v123, 0.0
      %v132 = vmax.f32 %v124, 0.0
      %v133 = vmax.f32 %v125, 0.0
      %v134 = vmax.f32 %v126, 0.0
      %v135 = vmax.f32 %v127, 0.0
      %v136 = vmax.f32 %v128, 0.0
      %v137 = vmax.f32 %v129, 0.0
      %v138 = vmax.f32 %v130, 0.0
      %v139 = vand.u32 2147483647, %v123
      %v140 = vand.u32 2147483647, %v124
      %v141 = vand.u32 2147483647, %v125
      %v142 = vand.u32 2147483647, %v126
      %v143 = vand.u32 2147483647, %v127
      %v144 = vand.u32 2147483647, %v128
      %v145 = vand.u32 2147483647, %v129
      %v146 = vand.u32 2147483647, %v130
      %v147 = vsub.f32 0.0, %v139
      %v148 = vsub.f32 0.0, %v140
      %v149 = vsub.f32 0.0, %v141
      %v150 = vsub.f32 0.0, %v142
      %v151 = vsub.f32 0.0, %v143
      %v152 = vsub.f32 0.0, %v144
      %v153 = vsub.f32 0.0, %v145
      %v154 = vsub.f32 0.0, %v146
      %v155 = vmul.f32 %v147, 1.442695
      %v156 = vpow.pop %v155
      %v157 = vmul.f32 %v148, 1.442695
      %v158 = vpow.pop %v157
      %v159 = vmul.f32 %v149, 1.442695
      %v160 = vpow.pop %v159
      %v161 = vmul.f32 %v150, 1.442695
      %v162 = vpow.pop %v161
      %v163 = vmul.f32 %v151, 1.442695
      %v164 = vpow.pop %v163
      %v165 = vmul.f32 %v152, 1.442695
      %v166 = vpow.pop %v165
      %v167 = vmul.f32 %v153, 1.442695
      %v168 = vpow.pop %v167
      %v169 = vmul.f32 %v154, 1.442695
      %v170 = vpow.pop %v169
      %v171 = vadd.f32 %v156, 1.0
      %v172 = vadd.f32 %v158, 1.0
      %v173 = vadd.f32 %v160, 1.0
      %v174 = vadd.f32 %v162, 1.0
      %v175 = vadd.f32 %v164, 1.0
      %v176 = vadd.f32 %v166, 1.0
      %v177 = vadd.f32 %v168, 1.0
      %v178 = vadd.f32 %v170, 1.0
      %v179 = vlog2.pop %v171
      %v180 = vmul.f32 %v179, 0.6931472
      %v181 = vlog2.pop %v172
      %v182 = vmul.f32 %v181, 0.6931472
      %v183 = vlog2.pop %v173
      %v184 = vmul.f32 %v183, 0.6931472
      %v185 = vlog2.pop %v174
      %v186 = vmul.f32 %v185, 0.6931472
      %v187 = vlog2.pop %v175
      %v188 = vmul.f32 %v187, 0.6931472
      %v189 = vlog2.pop %v176
      %v190 = vmul.f32 %v189, 0.6931472
      %v191 = vlog2.pop %v177
      %v192 = vmul.f32 %v191, 0.6931472
      %v193 = vlog2.pop %v178
      %v194 = vmul.f32 %v193, 0.6931472
      %v195 = vadd.f32 %v131, %v180
      %v196 = vadd.f32 %v132, %v182
      %v197 = vadd.f32 %v133, %v184
      %v198 = vadd.f32 %v134, %v186
      %v199 = vadd.f32 %v135, %v188
      %v200 = vadd.f32 %v136, %v190
      %v201 = vadd.f32 %v137, %v192
      %v202 = vadd.f32 %v138, %v194
      %v203 = vsel %vm99, %v195, 0.0
      %v204 = vsel %vm100, %v196, 0.0
      %v205 = vsel %vm101, %v197, 0.0
      %v206 = vsel %vm102, %v198, 0.0
      %v207 = vsel %vm103, %v199, 0.0
      %v208 = vsel %vm104, %v200, 0.0
      %v209 = vsel %vm105, %v201, 0.0
      %v210 = vsel %vm106, %v202, 0.0
      %211 = vadd.xlane.f32.xlu0 %v203
      %v212 = vpop.xlane.xlu0 %211
      %213 = vadd.xlane.f32.xlu0 %v204
      %v214 = vpop.xlane.xlu0 %213
      %215 = vadd.xlane.f32.xlu0 %v205
      %v216 = vpop.xlane.xlu0 %215
      %217 = vadd.xlane.f32.xlu0 %v206
      %v218 = vpop.xlane.xlu0 %217
      %219 = vadd.xlane.f32.xlu0 %v207
      %v220 = vpop.xlane.xlu0 %219
      %221 = vadd.xlane.f32.xlu0 %v208
      %v222 = vpop.xlane.xlu0 %221
      %223 = vadd.xlane.f32.xlu0 %v209
      %v224 = vpop.xlane.xlu0 %223
      %225 = vadd.xlane.f32.xlu0 %v210
      %v226 = vpop.xlane.xlu0 %225
      %v235 = vlaneseq
      %v236 = vand.u32 %v235, 127
      %v237 = vperm.slane %v212, %v236
      %v238 = vperm.slane %v214, %v236
      %v239 = vperm.slane %v216, %v236
      %v240 = vperm.slane %v218, %v236
      %v241 = vperm.slane %v220, %v236
      %v242 = vperm.slane %v222, %v236
      %v243 = vperm.slane %v224, %v236
      %v244 = vperm.slane %v226, %v236
      %vm245 = vcmask 1041409
      %v246 = vsel %vm245, %v238, %v237
      %vm247 = vcmask 1042434
      %v248 = vsel %vm247, %v239, %v246
      %vm249 = vcmask 1043459
      %v250 = vsel %vm249, %v240, %v248
      %vm251 = vcmask 1044484
      %v252 = vsel %vm251, %v241, %v250
      %vm253 = vcmask 1045509
      %v254 = vsel %vm253, %v242, %v252
      %vm255 = vcmask 1046534
      %v256 = vsel %vm255, %v243, %v254
      %vm257 = vcmask 1047559
      %v258 = vsel %vm257, %v244, %v256
      %vm260 = vcmask 64512
      %v261 = vsel %vm260, %v258, 0.0
      %262 = vadd.xlane.f32.xlu0 %v261
      %v263 = vpop.xlane.xlu0 %262
      %vm264 = vcmp.gt.f32.partialorder %v75, 0.0
      %vm265 = vcmp.gt.f32.partialorder %v76, 0.0
      %vm266 = vcmp.gt.f32.partialorder %v77, 0.0
      %vm267 = vcmp.gt.f32.partialorder %v78, 0.0
      %vm268 = vcmp.gt.f32.partialorder %v79, 0.0
      %vm269 = vcmp.gt.f32.partialorder %v80, 0.0
      %vm270 = vcmp.gt.f32.partialorder %v81, 0.0
      %vm271 = vcmp.gt.f32.partialorder %v82, 0.0
      %v272 = vsel %vm264, 1, 0
      %v273 = vsel %vm265, 1, 0
      %v274 = vsel %vm266, 1, 0
      %v275 = vsel %vm267, 1, 0
      %v276 = vsel %vm268, 1, 0
      %v277 = vsel %vm269, 1, 0
      %v278 = vsel %vm270, 1, 0
      %v279 = vsel %vm271, 1, 0
      %vm280 = vcmp.eq.s32.totalorder %v272, %v91
      %vm281 = vcmp.eq.s32.totalorder %v273, %v92
      %vm282 = vcmp.eq.s32.totalorder %v274, %v93
      %vm283 = vcmp.eq.s32.totalorder %v275, %v94
      %vm284 = vcmp.eq.s32.totalorder %v276, %v95
      %vm285 = vcmp.eq.s32.totalorder %v277, %v96
      %vm286 = vcmp.eq.s32.totalorder %v278, %v97
      %vm287 = vcmp.eq.s32.totalorder %v279, %v98
      %vm288 = vmand %vm99, %vm280
      %vm289 = vmand %vm100, %vm281
      %vm290 = vmand %vm101, %vm282
      %vm291 = vmand %vm102, %vm283
      %vm292 = vmand %vm103, %vm284
      %vm293 = vmand %vm104, %vm285
      %vm294 = vmand %vm105, %vm286
      %vm295 = vmand %vm106, %vm287
      %v296 = vsel %vm288, 1.0, 0.0
      %v297 = vsel %vm289, 1.0, 0.0
      %v298 = vsel %vm290, 1.0, 0.0
      %v299 = vsel %vm291, 1.0, 0.0
      %v300 = vsel %vm292, 1.0, 0.0
      %v301 = vsel %vm293, 1.0, 0.0
      %v302 = vsel %vm294, 1.0, 0.0
      %v303 = vsel %vm295, 1.0, 0.0
      %304 = vadd.xlane.f32.xlu0 %v296
      %v305 = vpop.xlane.xlu0 %304
      %306 = vadd.xlane.f32.xlu0 %v297
      %v307 = vpop.xlane.xlu0 %306
      %308 = vadd.xlane.f32.xlu0 %v298
      %v309 = vpop.xlane.xlu0 %308
      %310 = vadd.xlane.f32.xlu0 %v299
      %v311 = vpop.xlane.xlu0 %310
      %312 = vadd.xlane.f32.xlu0 %v300
      %v313 = vpop.xlane.xlu0 %312
      %314 = vadd.xlane.f32.xlu0 %v301
      %v315 = vpop.xlane.xlu0 %314
      %316 = vadd.xlane.f32.xlu0 %v302
      %v317 = vpop.xlane.xlu0 %316
      %318 = vadd.xlane.f32.xlu0 %v303
      %v319 = vpop.xlane.xlu0 %318
      %v328 = vperm.slane %v305, %v236
      %v329 = vperm.slane %v307, %v236
      %v330 = vperm.slane %v309, %v236
      %v331 = vperm.slane %v311, %v236
      %v332 = vperm.slane %v313, %v236
      %v333 = vperm.slane %v315, %v236
      %v334 = vperm.slane %v317, %v236
      %v335 = vperm.slane %v319, %v236
      %v336 = vsel %vm245, %v329, %v328
      %v337 = vsel %vm247, %v330, %v336
      %v338 = vsel %vm249, %v331, %v337
      %v339 = vsel %vm251, %v332, %v338
      %v340 = vsel %vm253, %v333, %v339
      %v341 = vsel %vm255, %v334, %v340
      %v342 = vsel %vm257, %v335, %v341
      %v344 = vsel %vm260, %v342, 0.0
      %345 = vadd.xlane.f32.xlu0 %v344
      %v346 = vpop.xlane.xlu0 %345
      %v347 = vld [vmem:[%s3] sm:$0xff]
      %vm348 = vcmp.eq.s32.totalorder %v236, 0
      %vm349 = vcmp.eq.s32.totalorder %v236, 1
      %v350 = vsel %vm349, %v346, 0.0
      %v351 = vsel %vm348, %v263, %v350
      %v352 = vadd.f32 %v347, %v351
      %353 = vst [vmem:[%s3] sm:$0xff] %v352
    $region25: #{_batched_loss_acc.1} parent=1 // pred_fallthru
      _
    // Predicated region
    $region26: #{_batched_loss_acc.1} parent=1 // pred_check
      _
    $region27: #{_batched_loss_acc.1} parent=1 // pred_check_branch
      %355 = sbr.rel (0) target = $region29
    $region28: #{_batched_loss_acc.1} parent=1 // pred_region
      _
    $region29: #{_batched_loss_acc.1} parent=1 // pred_fallthru
      _
    // Predicated region
    $region30: #{_batched_loss_acc.1} parent=1 // pred_check
      _
    $region31: #{_batched_loss_acc.1} parent=1 // pred_check_branch
      %357 = sbr.rel (0) target = $region33
    $region32: #{_batched_loss_acc.1} parent=1 // pred_region
      _
    $region33: #{_batched_loss_acc.1} parent=1 // pred_fallthru
      _
    %358 = vsyncpa [#allocation5], 1
    %359 = vsyncpa [#allocation7], 1

</llo_original>
